<compile_context>
chip_gen: v7x
topology: tpu7x:2x2x1
jax: 0.10.0
libtpu: 0.0.40
codegen_flags: <defaults>
</compile_context>

<pallas_src>
import numpy as np
import jax
import jax.numpy as jnp
from jax.experimental import pallas as pl
from jax.experimental.pallas import tpu as pltpu


def _make_kernel(C, L, TL, TB, inv_L):
    def kernel(x_ref, w1t_ref, w2t_ref, o_ref, acc_sum, acc_max):
        # x_ref:   (TB, C, TL)  current L tile of TB batch rows
        # w1t_ref: (C, Cr)      fc1 weight, transposed
        # w2t_ref: (Cr, C)      fc2 weight, transposed
        # o_ref:   (TB, 1, C)   lane-dense output row per batch row
        li = pl.program_id(1)

        @pl.when(li == 0)
        def _init():
            acc_sum[...] = jnp.zeros_like(acc_sum)
            acc_max[...] = jnp.full_like(acc_max, -jnp.inf)

        # Per-lane (VPU) accumulation of the L reduction; the partial last
        # tile (L % TL != 0) is masked out of both sum and max.
        x = x_ref[...].astype(jnp.float32)                        # (TB, C, TL)
        lane = jax.lax.broadcasted_iota(jnp.int32, x.shape, 2) + li * TL
        valid = lane < L
        acc_sum[...] = acc_sum[...] + jnp.where(valid, x, 0.0)
        acc_max[...] = jnp.maximum(acc_max[...], jnp.where(valid, x, -jnp.inf))

        @pl.when(li == pl.num_programs(1) - 1)
        def _finalize():
            s = jnp.sum(acc_sum[...], axis=2) * inv_L             # (TB, C) mean
            m = jnp.max(acc_max[...], axis=2)                     # (TB, C) max
            pooled = jnp.concatenate([s, m], axis=0)              # (2*TB, C)
            # Fused MLP: avg and max paths share one fc1 + one fc2 matmul.
            h = jnp.dot(pooled, w1t_ref[...],
                        preferred_element_type=jnp.float32)       # (2*TB, Cr)
            h = jnp.maximum(h, 0.0)                               # ReLU
            z2 = jnp.dot(h, w2t_ref[...],
                         preferred_element_type=jnp.float32)      # (2*TB, C)
            z = z2[:TB, :] + z2[TB:, :]                           # (TB, C)
            o_ref[...] = jax.nn.sigmoid(z)[:, None, :].astype(o_ref.dtype)

    return kernel


def _choose_tb(B):
    for tb in (8, 4, 2, 1):
        if B % tb == 0:
            return tb
    return 1


def _choose_tl(C, L, tb, budget_bytes=16 * 1024 * 1024):
    # Budget covers the four (TB, C, TL) f32 tiles that scale with TL
    # (2 double-buffered x tiles + sum/max accumulators).  This keeps the
    # kernel comfortably inside v7x's 64 MiB VMEM while still giving large
    # lane-deep tiles on v5e/v6e-sized channel counts.
    if L <= 128:
        return L
    per_col = 4 * tb * C * 4
    tl = max(128, (budget_bytes // max(per_col, 1)) // 128 * 128)
    return L if tl >= L else tl


def channel_attention(x, w1, w2, *, tb=None, tl=None):
    """x: (B, C, L); w1: (C//r, C); w2: (C, C//r).  Returns (B, C, 1)."""
    B, C, L = x.shape
    Cr = w1.shape[0]
    assert w1.shape == (Cr, C) and w2.shape == (C, Cr)

    if tb is None:
        tb = _choose_tb(B)
    assert B % tb == 0, f"batch tile {tb} must divide B={B}"
    if tl is None:
        tl = _choose_tl(C, L, tb)

    grid = (B // tb, pl.cdiv(L, tl))

    # Pre-transpose the 1x1-conv weights once on the host so the in-kernel MLP
    # keeps C on the lane axis (lane-dense matmuls and output stores).
    w1t = jnp.asarray(w1).T        # (C, Cr)
    w2t = jnp.asarray(w2).T        # (Cr, C)

    itemsize = jnp.dtype(x.dtype).itemsize
    vmem_est = (2 * tb * C * tl * itemsize      # double-buffered x tile
                + 2 * tb * C * tl * 4           # f32 sum/max accumulators
                + 2 * 2 * C * Cr * 4            # double-buffered weights
                + 2 * tb * C * 4)               # double-buffered output block
    vmem_limit = int(min(64 * 1024 * 1024, max(16 * 1024 * 1024, 2 * vmem_est)))

    kernel = _make_kernel(C, L, tl, tb, 1.0 / L)

    out = pl.pallas_call(
        kernel,
        out_shape=jax.ShapeDtypeStruct((B, 1, C), x.dtype),
        grid_spec=pltpu.PrefetchScalarGridSpec(
            num_scalar_prefetch=0,
            grid=grid,
            in_specs=[
                pl.BlockSpec((tb, C, tl), lambda b, l: (b, 0, l)),
                # Constant index maps -> weights fetched once per launch.
                # (Could add pipeline_mode=pl.Buffered(1) to reclaim the
                # second weight buffer on VMEM-tight configs.)
                pl.BlockSpec((C, Cr), lambda b, l: (0, 0)),
                pl.BlockSpec((Cr, C), lambda b, l: (0, 0)),
            ],
            out_specs=pl.BlockSpec((tb, 1, C), lambda b, l: (b, 0, 0)),
            scratch_shapes=[
                pltpu.VMEM((tb, C, tl), jnp.float32),   # running sum
                pltpu.VMEM((tb, C, tl), jnp.float32),   # running max
            ],
        ),
        compiler_params=pltpu.CompilerParams(
            dimension_semantics=("parallel", "arbitrary"),
            vmem_limit_bytes=vmem_limit,
        ),
    )(x, w1t, w2t)

    # (B, 1, C) -> (B, C, 1): identical linear order, pure metadata reshape.
    return out.reshape(B, C, 1)


def channel_attention_ref(x, w1, w2):
    """Pure-JAX reference mirroring the PyTorch forward."""
    avg = jnp.mean(x, axis=-1, keepdims=True)                     # (B, C, 1)
    mxv = jnp.max(x, axis=-1, keepdims=True)                      # (B, C, 1)

    def mlp(v):
        h = jnp.einsum("rc,bcl->brl", w1, v)
        h = jnp.maximum(h, 0.0)
        return jnp.einsum("cr,brl->bcl", w2, h)

    return jax.nn.sigmoid(mlp(avg) + mlp(mxv))


if __name__ == "__main__":
    B, C, L = 2, 8, 300          # L deliberately NOT a multiple of the tile
    ratio = 4
    Cr = C // ratio

    key = jax.random.PRNGKey(0)
    kx, kw1, kw2 = jax.random.split(key, 3)

    x = jax.random.normal(kx, (B, C, L), dtype=jnp.float32)
    # Conv1d weights (out, in, 1) squeezed to (out, in); deterministic init.
    w1 = jax.random.normal(kw1, (Cr, C), dtype=jnp.float32) / np.sqrt(C)
    w2 = jax.random.normal(kw2, (C, Cr), dtype=jnp.float32) / np.sqrt(Cr)

    # tl=128 forces the multi-tile L path (3 tiles, last one masked) even at
    # this small demo size; for real shapes leave tl=None for auto-sizing.
    out = jax.block_until_ready(channel_attention(x, w1, w2, tl=128))

    ref = channel_attention_ref(x, w1, w2)
    assert out.shape == (B, C, 1)
    np.testing.assert_allclose(np.asarray(out), np.asarray(ref),
                               rtol=1e-5, atol=1e-5)
    print("KERNEL_OK")
</pallas_src>

<mosaic_0001>
module attributes {stable_mosaic.version = 11 : i64} {
  func.func @kernel(%arg0: i32, %arg1: i32, %arg2: memref<2x8x128xf32, #tpu.memory_space<vmem>>, %arg3: memref<8x2xf32, #tpu.memory_space<vmem>>, %arg4: memref<2x8xf32, #tpu.memory_space<vmem>>, %arg5: memref<2x1x8xf32, #tpu.memory_space<vmem>>, %arg6: memref<2x8x128xf32, #tpu.memory_space<vmem>>, %arg7: memref<2x8x128xf32, #tpu.memory_space<vmem>>) attributes {dimension_semantics = [#tpu.dimension_semantics<parallel>, #tpu.dimension_semantics<arbitrary>], iteration_bounds = array<i64: 1, 3>, scalar_prefetch = 0 : i64, scratch_operands = 2 : i64, tpu.core_type = #tpu.core_type<tc>, window_params = [{transform_indices = @transform_0, window_bounds = array<i64: 2, 8, 128>}, {pipeline_mode = #tpu.pipeline_mode<synchronous>, transform_indices = @transform_1, window_bounds = array<i64: 8, 2>}, {pipeline_mode = #tpu.pipeline_mode<synchronous>, transform_indices = @transform_2, window_bounds = array<i64: 2, 8>}, {transform_indices = @transform_3, window_bounds = array<i64: 2, 1, 8>}]} {
    %c0_i32 = arith.constant 0 : i32
    %0 = arith.cmpi eq, %arg1, %c0_i32 : i32
    %1 = arith.extui %0 : i1 to i32
    %c0_i32_0 = arith.constant 0 : i32
    %2 = arith.cmpi ne, %1, %c0_i32_0 : i32
    scf.if %2 {
      %cst_17 = arith.constant 0.000000e+00 : f32
      %23 = vector.broadcast %cst_17 : f32 to vector<2x8x128xf32>
      %c0_18 = arith.constant 0 : index
      %c0_19 = arith.constant 0 : index
      %c0_20 = arith.constant 0 : index
      %24 = vector.load %arg6[%c0_18, %c0_19, %c0_20] : memref<2x8x128xf32, #tpu.memory_space<vmem>>, vector<2x8x128xf32>
      tpu.vector_store %arg6[%c0_18, %c0_19, %c0_20], %23 {strides = array<i32>} : memref<2x8x128xf32, #tpu.memory_space<vmem>>, vector<2x8x128xf32>,
      %cst_21 = arith.constant 0xFF800000 : f32
      %25 = vector.broadcast %cst_21 : f32 to vector<2x8x128xf32>
      %c0_22 = arith.constant 0 : index
      %c0_23 = arith.constant 0 : index
      %c0_24 = arith.constant 0 : index
      %26 = vector.load %arg7[%c0_22, %c0_23, %c0_24] : memref<2x8x128xf32, #tpu.memory_space<vmem>>, vector<2x8x128xf32>
      tpu.vector_store %arg7[%c0_22, %c0_23, %c0_24], %25 {strides = array<i32>} : memref<2x8x128xf32, #tpu.memory_space<vmem>>, vector<2x8x128xf32>,
    } else {
    }
    %c0 = arith.constant 0 : index
    %c0_1 = arith.constant 0 : index
    %c0_2 = arith.constant 0 : index
    %3 = vector.load %arg2[%c0, %c0_1, %c0_2] : memref<2x8x128xf32, #tpu.memory_space<vmem>>, vector<2x8x128xf32>
    %4 = tpu.iota {dimensions = array<i32: 2>} : vector<2x8x128xi32>
    %c128_i32 = arith.constant 128 : i32
    %5 = arith.muli %arg1, %c128_i32 : i32
    %6 = vector.broadcast %5 : i32 to vector<2x8x128xi32>
    %7 = arith.addi %4, %6 : vector<2x8x128xi32>
    %c300_i32 = arith.constant 300 : i32
    %8 = vector.broadcast %c300_i32 : i32 to vector<2x8x128xi32>
    %9 = arith.cmpi slt, %7, %8 : vector<2x8x128xi32>
    %c0_3 = arith.constant 0 : index
    %c0_4 = arith.constant 0 : index
    %c0_5 = arith.constant 0 : index
    %10 = vector.load %arg6[%c0_3, %c0_4, %c0_5] : memref<2x8x128xf32, #tpu.memory_space<vmem>>, vector<2x8x128xf32>
    %cst = arith.constant 0.000000e+00 : f32
    %11 = vector.broadcast %cst : f32 to vector<2x8x128xf32>
    %12 = arith.select %9, %3, %11 : vector<2x8x128xi1>, vector<2x8x128xf32>
    %13 = arith.addf %10, %12 : vector<2x8x128xf32>
    %c0_6 = arith.constant 0 : index
    %c0_7 = arith.constant 0 : index
    %c0_8 = arith.constant 0 : index
    %14 = vector.load %arg6[%c0_6, %c0_7, %c0_8] : memref<2x8x128xf32, #tpu.memory_space<vmem>>, vector<2x8x128xf32>
    tpu.vector_store %arg6[%c0_6, %c0_7, %c0_8], %13 {strides = array<i32>} : memref<2x8x128xf32, #tpu.memory_space<vmem>>, vector<2x8x128xf32>,
    %c0_9 = arith.constant 0 : index
    %c0_10 = arith.constant 0 : index
    %c0_11 = arith.constant 0 : index
    %15 = vector.load %arg7[%c0_9, %c0_10, %c0_11] : memref<2x8x128xf32, #tpu.memory_space<vmem>>, vector<2x8x128xf32>
    %cst_12 = arith.constant 0xFF800000 : f32
    %16 = vector.broadcast %cst_12 : f32 to vector<2x8x128xf32>
    %17 = arith.select %9, %3, %16 : vector<2x8x128xi1>, vector<2x8x128xf32>
    %18 = arith.maximumf %15, %17 : vector<2x8x128xf32>
    %c0_13 = arith.constant 0 : index
    %c0_14 = arith.constant 0 : index
    %c0_15 = arith.constant 0 : index
    %19 = vector.load %arg7[%c0_13, %c0_14, %c0_15] : memref<2x8x128xf32, #tpu.memory_space<vmem>>, vector<2x8x128xf32>
    tpu.vector_store %arg7[%c0_13, %c0_14, %c0_15], %18 {strides = array<i32>} : memref<2x8x128xf32, #tpu.memory_space<vmem>>, vector<2x8x128xf32>,
    %c2_i32 = arith.constant 2 : i32
    %20 = arith.cmpi eq, %arg1, %c2_i32 : i32
    %21 = arith.extui %20 : i1 to i32
    %c0_i32_16 = arith.constant 0 : i32
    %22 = arith.cmpi ne, %21, %c0_i32_16 : i32
    scf.if %22 {
      %c0_17 = arith.constant 0 : index
      %c0_18 = arith.constant 0 : index
      %c0_19 = arith.constant 0 : index
      %23 = vector.load %arg6[%c0_17, %c0_18, %c0_19] : memref<2x8x128xf32, #tpu.memory_space<vmem>>, vector<2x8x128xf32>
      %cst_20 = arith.constant dense<0.000000e+00> : vector<2x8xf32>
      %24 = vector.multi_reduction <add>, %23, %cst_20 [2] : vector<2x8x128xf32> to vector<2x8xf32>
      %cst_21 = arith.constant 0.00333333341 : f32
      %25 = vector.broadcast %cst_21 : f32 to vector<2x8xf32>
      %26 = arith.mulf %24, %25 : vector<2x8xf32>
      %c0_22 = arith.constant 0 : index
      %c0_23 = arith.constant 0 : index
      %c0_24 = arith.constant 0 : index
      %27 = vector.load %arg7[%c0_22, %c0_23, %c0_24] : memref<2x8x128xf32, #tpu.memory_space<vmem>>, vector<2x8x128xf32>
      %cst_25 = arith.constant dense<0xFF800000> : vector<2x8xf32>
      %28 = vector.multi_reduction <maximumf>, %27, %cst_25 [2] : vector<2x8x128xf32> to vector<2x8xf32>
      %29 = tpu.concatenate %26, %28 in 0 : vector<2x8xf32>, vector<2x8xf32> -> vector<4x8xf32>
      %c0_26 = arith.constant 0 : index
      %c0_27 = arith.constant 0 : index
      %30 = vector.load %arg3[%c0_26, %c0_27] : memref<8x2xf32, #tpu.memory_space<vmem>>, vector<8x2xf32>
      %cst_28 = arith.constant dense<0.000000e+00> : vector<4x2xf32>
      %31 = tpu.matmul %29, %30, %cst_28 {dimension_numbers = #tpu.dot_dimension_numbers<[1], [0], [0], [1], [0, 0, 1, 1], [], []>} : vector<4x8xf32>, vector<8x2xf32>, vector<4x2xf32> -> vector<4x2xf32>
      %cst_29 = arith.constant 0.000000e+00 : f32
      %32 = vector.broadcast %cst_29 : f32 to vector<4x2xf32>
      %33 = arith.maximumf %31, %32 : vector<4x2xf32>
      %c0_30 = arith.constant 0 : index
      %c0_31 = arith.constant 0 : index
      %34 = vector.load %arg4[%c0_30, %c0_31] : memref<2x8xf32, #tpu.memory_space<vmem>>, vector<2x8xf32>
      %cst_32 = arith.constant dense<0.000000e+00> : vector<4x8xf32>
      %35 = tpu.matmul %33, %34, %cst_32 {dimension_numbers = #tpu.dot_dimension_numbers<[1], [0], [0], [1], [0, 0, 1, 1], [], []>} : vector<4x2xf32>, vector<2x8xf32>, vector<4x8xf32> -> vector<4x8xf32>
      %36 = vector.extract_strided_slice %35 {offsets = [0, 0], sizes = [2, 8], strides = [1, 1]} : vector<4x8xf32> to vector<2x8xf32>
      %37 = vector.extract_strided_slice %35 {offsets = [2, 0], sizes = [2, 8], strides = [1, 1]} : vector<4x8xf32> to vector<2x8xf32>
      %38 = arith.addf %36, %37 : vector<2x8xf32>
      %39 = arith.negf %38 : vector<2x8xf32>
      %40 = math.exp %39 : vector<2x8xf32>
      %cst_33 = arith.constant 1.000000e+00 : f32
      %41 = vector.broadcast %cst_33 : f32 to vector<2x8xf32>
      %42 = arith.addf %41, %40 : vector<2x8xf32>
      %43 = arith.divf %41, %42 : vector<2x8xf32>
      %44 = vector.shape_cast %43 : vector<2x8xf32> to vector<2x1x8xf32>
      %c0_34 = arith.constant 0 : index
      %c0_35 = arith.constant 0 : index
      %c0_36 = arith.constant 0 : index
      %45 = vector.load %arg5[%c0_34, %c0_35, %c0_36] : memref<2x1x8xf32, #tpu.memory_space<vmem>>, vector<2x1x8xf32>
      tpu.vector_store %arg5[%c0_34, %c0_35, %c0_36], %44 {strides = array<i32>} : memref<2x1x8xf32, #tpu.memory_space<vmem>>, vector<2x1x8xf32>,
    } else {
    }
    return
  }
  func.func @transform_0(%arg0: i32, %arg1: i32) -> (i32, i32, i32) {
    %c0_i32 = arith.constant 0 : i32
    %c0_i32_0 = arith.constant 0 : i32
    return %arg0, %c0_i32, %arg1 : i32, i32, i32
  }
  func.func @transform_1(%arg0: i32, %arg1: i32) -> (i32, i32) {
    %c0_i32 = arith.constant 0 : i32
    %c0_i32_0 = arith.constant 0 : i32
    %c0_i32_1 = arith.constant 0 : i32
    return %c0_i32, %c0_i32_0 : i32, i32
  }
  func.func @transform_2(%arg0: i32, %arg1: i32) -> (i32, i32) {
    %c0_i32 = arith.constant 0 : i32
    %c0_i32_0 = arith.constant 0 : i32
    %c0_i32_1 = arith.constant 0 : i32
    return %c0_i32, %c0_i32_0 : i32, i32
  }
  func.func @transform_3(%arg0: i32, %arg1: i32) -> (i32, i32, i32) {
    %c0_i32 = arith.constant 0 : i32
    %c0_i32_0 = arith.constant 0 : i32
    %c0_i32_1 = arith.constant 0 : i32
    return %arg0, %c0_i32, %c0_i32_0 : i32, i32, i32
  }
}

</mosaic_0001>

<llo_original>
// kernel: tpu_custom_call.1
$region0: #{tpu_custom_call.1}
  #allocation0 [shape = 'u32[]', space=smem, size = 0x4, offset = 0x4, fixed_abs, tag = 'smem constant byte address 0x4 - core index']
  #allocation1 [shape = 'u32[144,128]{1,0:T(1,128)}', space=vmem, size = 0x12000, scoped, tag = 'internal scratch']
  #allocation2 [shape = 'f32[2,8,128]{2,1,0:T(8,128)}', space=vmem, size = 0x2000, scoped, tag = 'scratch operand']
  #allocation3 [shape = 'f32[2,8,128]{2,1,0:T(8,128)}', space=vmem, size = 0x2000, scoped, tag = 'scratch operand']
  %s0 = inlined_call_operand.hbm [shape: f32[2,8,300], index: 0, kind: input, shape index: {}]
  %s1 = inlined_call_operand.vmem [shape: f32[8,2], index: 1, kind: input, shape index: {}]
  %s2 = inlined_call_operand.vmem [shape: f32[2,8], index: 2, kind: input, shape index: {}]
  %s3 = inlined_call_operand.hbm [shape: f32[2,1,8], index: 3, kind: output, shape index: {}]
  %s4 = sld [smem:[#allocation0]]
  $region57: #{tpu_custom_call.1} parent=0
    _
  %s6 = ssub.s32 1, %s4
  %s7 = scalar_select 0, %s6, %s4
  $region1: #{tpu_custom_call.1} parent=0
    #allocation4 [shape = 'u8[16384]{0}', space=vmem, size = 0x4000, scoped, tag = 'input window, operand 0']
    #allocation5 [shape = 's32[2]{0}', space=sflag, size = 0x8, scoped, tag = 'scoped memory for tpu_custom_call.1']
    #allocation6 [shape = 's32[2]{0}', space=sflag, size = 0x8, scoped, tag = 'scoped memory for tpu_custom_call.1']
    #allocation7 [shape = 'u8[1024]{0}', space=vmem, size = 0x400, scoped, tag = 'output window, operand 0, single buffered']
    %8 = vsyncpa [#allocation5], 0
    %s9 = scalar_lea.sflag [#allocation5], 1
    %10 = vsyncpa %s9, 0
    %11 = vsyncpa [#allocation6], 0
    loop: start=0, step=1, limit=5
    $region2: #{tpu_custom_call.1} parent=1 // loop_pre_header
      _
    $region3: #{tpu_custom_call.1} parent=1 // loop_header
      %s13 = sphi 0, %s17
      %p14 = scmp.ge.s32.totalorder %s13, 5
      %s20 = sphi 0, %s32
      %s21 = sphi 0, %s28
      %s22 = sphi 0, %s20
      %s23 = sphi 0, %s21
      %s24 = sphi 0, %s22
      %s25 = sphi 0, %s23
      %s37 = sphi 0, %s39
      %s40 = sphi 0, %s37
      %s41 = sphi 0, %s40
      %s57 = sphi 0, %s41
      %s61 = sphi 0, %s61
      %s63 = sphi 0, %s61
      %s64 = sphi 0, %s63
      %s78 = sphi 0, %s64
      %s82 = sphi 0, %s82
      %s84 = sphi 0, %s82
      %s85 = sphi 0, %s84
      %s99 = sphi 0, %s85
      %s105 = sphi 0, %s107
      %s108 = sphi 0, %s105
      %s109 = sphi 0, %s108
      %s125 = sphi 0, %s109
    $region4: #{tpu_custom_call.1} parent=1 // loop_header_branch
      %16 = sbr.rel (%p14) target = $region8
    $region5: #{tpu_custom_call.1} parent=1 // loop_body
      %s18 = ssub.s32 %s13, 1
      %s19 = ssub.s32 %s13, 2
      %s26 = sadd.s32 1, %s21
      %p27 = scmp.ge.s32.totalorder %s26, 3
      %s28 = scalar_select %p27, 0, %s26
      %s29 = sadd.s32 1, %s20
      %s30 = scalar_select %p27, %s29, %s20
      %p31 = scmp.ge.s32.totalorder %s30, 1
      %s32 = scalar_select %p31, 0, %s30
      %s33 = ssub.s32 %s20, %s32
      %s34 = ssub.s32 %s21, %s28
      %s35 = sor.u32 %s33, %s34
      %p36 = scmp.eq.s32.totalorder %s35, 0
      %s38 = sadd.s32 %s37, 1
      %s39 = scalar_select %p36, %s37, %s38
      %p42 = pneg %p36
      %p43 = scmp.eq.s32.totalorder %s13, 2
      %p44 = por %p42, %p43
      %p45 = scmp.ne.s32.totalorder %s37, %s40
      %p46 = scmp.eq.s32.totalorder %s13, 0
      %p47 = por %p45, %p46
      %p48 = scmp.ne.s32.totalorder %s37, %s40
      %p49 = scmp.eq.s32.totalorder %s18, 2
      %p50 = por %p48, %p49
      %p51 = scmp.ne.s32.totalorder %s40, %s41
      %p52 = scmp.eq.s32.totalorder %s18, 0
      %p53 = por %p51, %p52
      %p54 = scmp.ne.s32.totalorder %s40, %s41
      %p55 = scmp.eq.s32.totalorder %s19, 2
      %p56 = por %p54, %p55
      %p58 = scmp.ne.s32.totalorder %s41, %s57
      %p59 = scmp.eq.s32.totalorder %s19, 0
      %p60 = por %p58, %p59
      %s62 = sadd.s32 %s61, 1
      %p65 = scmp.eq.s32.totalorder %s13, 2
      %p66 = scmp.ne.s32.totalorder %s61, %s63
      %p67 = scmp.eq.s32.totalorder %s13, 0
      %p68 = por %p66, %p67
      %p69 = scmp.ne.s32.totalorder %s61, %s63
      %p70 = scmp.eq.s32.totalorder %s18, 2
      %p71 = por %p69, %p70
      %p72 = scmp.ne.s32.totalorder %s63, %s64
      %p73 = scmp.eq.s32.totalorder %s18, 0
      %p74 = por %p72, %p73
      %p75 = scmp.ne.s32.totalorder %s63, %s64
      %p76 = scmp.eq.s32.totalorder %s19, 2
      %p77 = por %p75, %p76
      %p79 = scmp.ne.s32.totalorder %s64, %s78
      %p80 = scmp.eq.s32.totalorder %s19, 0
      %p81 = por %p79, %p80
      %s83 = sadd.s32 %s82, 1
      %p86 = scmp.eq.s32.totalorder %s13, 2
      %p87 = scmp.ne.s32.totalorder %s82, %s84
      %p88 = scmp.eq.s32.totalorder %s13, 0
      %p89 = por %p87, %p88
      %p90 = scmp.ne.s32.totalorder %s82, %s84
      %p91 = scmp.eq.s32.totalorder %s18, 2
      %p92 = por %p90, %p91
      %p93 = scmp.ne.s32.totalorder %s84, %s85
      %p94 = scmp.eq.s32.totalorder %s18, 0
      %p95 = por %p93, %p94
      %p96 = scmp.ne.s32.totalorder %s84, %s85
      %p97 = scmp.eq.s32.totalorder %s19, 2
      %p98 = por %p96, %p97
      %p100 = scmp.ne.s32.totalorder %s85, %s99
      %p101 = scmp.eq.s32.totalorder %s19, 0
      %p102 = por %p100, %p101
      %s103 = ssub.s32 %s20, %s32
      %p104 = scmp.eq.s32.totalorder %s103, 0
      %s106 = sadd.s32 %s105, 1
      %s107 = scalar_select %p104, %s105, %s106
      %p110 = pneg %p104
      %p111 = scmp.eq.s32.totalorder %s13, 2
      %p112 = por %p110, %p111
      %p113 = scmp.ne.s32.totalorder %s105, %s108
      %p114 = scmp.eq.s32.totalorder %s13, 0
      %p115 = por %p113, %p114
      %p116 = scmp.ne.s32.totalorder %s105, %s108
      %p117 = scmp.eq.s32.totalorder %s18, 2
      %p118 = por %p116, %p117
      %p119 = scmp.ne.s32.totalorder %s108, %s109
      %p120 = scmp.eq.s32.totalorder %s18, 0
      %p121 = por %p119, %p120
      %p122 = scmp.ne.s32.totalorder %s108, %s109
      %p123 = scmp.eq.s32.totalorder %s19, 2
      %p124 = por %p122, %p123
      %p126 = scmp.ne.s32.totalorder %s109, %s125
      %p127 = scmp.eq.s32.totalorder %s19, 0
      %p128 = por %p126, %p127
      %p129 = scmp.le.s32.totalorder 1, %s13
      %p130 = scmp.lt.s32.totalorder %s13, 4
      %p131 = pnand %p129, %p130
      %p132 = pneg %p131
      // Predicated region
      $region9: #{tpu_custom_call.1} parent=5 // pred_check
        _
      $region10: #{tpu_custom_call.1} parent=5 // pred_check_branch
        %134 = sbr.rel (%p131) target = $region12
      $region11: #{tpu_custom_call.1} parent=5 // pred_region
        %s135 = ssub.s32 %s13, 1
        // Predicated region
        $region13: #{tpu_custom_call.1} parent=11 // pred_check
          %p136 = pneg %p74
        $region14: #{tpu_custom_call.1} parent=11 // pred_check_branch
          %138 = sbr.rel (%p136) target = $region16
        $region15: #{tpu_custom_call.1} parent=11 // pred_region
          _
        $region16: #{tpu_custom_call.1} parent=11 // pred_fallthru
          _
        // Predicated region
        $region17: #{tpu_custom_call.1} parent=11 // pred_check
          %p139 = pneg %p95
        $region18: #{tpu_custom_call.1} parent=11 // pred_check_branch
          %141 = sbr.rel (%p139) target = $region20
        $region19: #{tpu_custom_call.1} parent=11 // pred_region
          _
        $region20: #{tpu_custom_call.1} parent=11 // pred_fallthru
          _
      $region12: #{tpu_custom_call.1} parent=5 // pred_fallthru
        _
      %p142 = scmp.lt.s32.totalorder %s13, 3
      // Predicated region
      $region21: #{tpu_custom_call.1} parent=5 // pred_check
        %p143 = pneg %p142
      $region22: #{tpu_custom_call.1} parent=5 // pred_check_branch
        %145 = sbr.rel (%p143) target = $region24
      $region23: #{tpu_custom_call.1} parent=5 // pred_region
        // Predicated region
        $region25: #{tpu_custom_call.1} parent=23 // pred_check
          %p146 = pneg %p47
        $region26: #{tpu_custom_call.1} parent=23 // pred_check_branch
          %148 = sbr.rel (%p146) target = $region28
        $region27: #{tpu_custom_call.1} parent=23 // pred_region
          %s149 = sand.u32 %s37, 1
          %s150 = scalar_lea.sflag [#allocation5], %s149
          %s151 = sand.u32 %s37, 1
          %s152 = smul.addr %s151, 16
          %s153 = scalar_lea.vmem [#allocation4], %s152
          %s154 = smul.u32 2, %s20
          %s156 = ssub.s32 256, 256
          %157 = vsyncadd %s150, %s156
          %s158 = smul.addr %s154, 3
          %s159 = sadd.s32 %s21, %s158
          %s160 = smul.addr %s159, 128
          %s161 = scalar_lea.hbm %s0, %s160
          %s162 = sshll.u32 %s153, 4
          %s163 = int_to_ptr.vmem [resolvable:$true] %s162
          %168 = dma.hbm_to_vmem [thread:$0]  %s161, 256, %s163, %s150, 384, 128, 8
        $region28: #{tpu_custom_call.1} parent=23 // pred_fallthru
          _
      $region24: #{tpu_custom_call.1} parent=5 // pred_fallthru
        _
      %p169 = scmp.le.s32.totalorder 1, %s13
      %p170 = scmp.lt.s32.totalorder %s13, 4
      %p171 = pnand %p169, %p170
      %p172 = pneg %p171
      // Predicated region
      $region29: #{tpu_custom_call.1} parent=5 // pred_check
        _
      $region30: #{tpu_custom_call.1} parent=5 // pred_check_branch
        %174 = sbr.rel (%p171) target = $region32
      $region31: #{tpu_custom_call.1} parent=5 // pred_region
        %s175 = ssub.s32 %s13, 1
        %s176 = sand.u32 %s40, 1
        %s177 = scalar_lea.sflag [#allocation5], %s176
        %s178 = sand.u32 %s40, 1
        %s179 = smul.addr %s178, 16
        %s180 = scalar_lea.vmem [#allocation4], %s179
        // Predicated region
        $region33: #{tpu_custom_call.1} parent=31 // pred_check
          %p181 = pneg %p53
        $region34: #{tpu_custom_call.1} parent=31 // pred_check_branch
          %183 = sbr.rel (%p181) target = $region36
        $region35: #{tpu_custom_call.1} parent=31 // pred_region
          %184 = dma.done %s177, 256
        $region36: #{tpu_custom_call.1} parent=31 // pred_fallthru
          _
        %s185 = sand.u32 %s40, 1
        %s186 = scalar_lea.sflag [#allocation5], %s185
        %s187 = sand.u32 %s40, 1
        %s188 = smul.addr %s187, 16
        %s189 = scalar_lea.vmem [#allocation4], %s188
        %p190 = pneg %p53
        %p191 = pneg %p50
        %p192 = pneg %p74
        %p193 = pneg %p71
        %p194 = pneg %p95
        %p195 = pneg %p92
        %p196 = pneg %p121
        %p197 = pneg %p118
        %s198 = smul.u32 2, %s22
        %s199 = smul.u32 2, %s22
        %p200 = scmp.eq.s32.totalorder %s23, 0
        // Predicated region
        $region37: #{tpu_custom_call.1} parent=31 // pred_check
          %p201 = pneg %p200
        $region38: #{tpu_custom_call.1} parent=31 // pred_check_branch
          %203 = sbr.rel (%p201) target = $region40
        $region39: #{tpu_custom_call.1} parent=31 // pred_region
          %204 = vst [vmem:[#allocation2] sm:$0xff] 0.0
          %205 = vst [vmem:[#allocation2 + $0x8] sm:$0xff] 0.0
          %206 = vst [vmem:[#allocation3] sm:$0xff] -inf
          %207 = vst [vmem:[#allocation3 + $0x8] sm:$0xff] -inf
        $region40: #{tpu_custom_call.1} parent=31 // pred_fallthru
          _
        %v208 = vld [vmem:[%s180] sm:$0xff]
        %v209 = vld [vmem:[%s180 + $0x8] sm:$0xff]
        %v210 = vlaneseq
        %v211 = vand.u32 %v210, 127
        %s212 = smul.u32 %s23, 128
        %v213 = vstv %s212
        %v214 = vadd.s32 %v211, %v213
        %vm215 = vcmp.lt.s32.totalorder %v214, 300
        %v216 = vld [vmem:[#allocation2] sm:$0xff]
        %v217 = vld [vmem:[#allocation2 + $0x8] sm:$0xff]
        %v218 = vsel %vm215, %v208, 0.0
        %v219 = vsel %vm215, %v209, 0.0
        %v220 = vadd.f32 %v216, %v218
        %v221 = vadd.f32 %v217, %v219
        %222 = vst [vmem:[#allocation2] sm:$0xff] %v220
        %223 = vst [vmem:[#allocation2 + $0x8] sm:$0xff] %v221
        %v224 = vld [vmem:[#allocation3] sm:$0xff]
        %v225 = vld [vmem:[#allocation3 + $0x8] sm:$0xff]
        %v226 = vsel %vm215, %v208, -inf
        %v227 = vsel %vm215, %v209, -inf
        %v228 = vmax.f32 %v224, %v226
        %v229 = vmax.f32 %v225, %v227
        %230 = vst [vmem:[#allocation3] sm:$0xff] %v228
        %231 = vst [vmem:[#allocation3 + $0x8] sm:$0xff] %v229
        %p232 = scmp.eq.s32.totalorder %s23, 2
        // Predicated region
        $region41: #{tpu_custom_call.1} parent=31 // pred_check
          %p233 = pneg %p232
        $region42: #{tpu_custom_call.1} parent=31 // pred_check_branch
          %235 = sbr.rel (%p233) target = $region44
        $region43: #{tpu_custom_call.1} parent=31 // pred_region
          %v236 = vld [vmem:[#allocation2] sm:$0xff]
          %v237 = vld [vmem:[#allocation2 + $0x8] sm:$0xff]
          %238 = vadd.xlane.f32.xlu0 %v236
          %v239 = vpop.xlane.xlu0 %238
          %240 = vadd.xlane.f32.xlu0 %v237
          %v241 = vpop.xlane.xlu0 %240
          %v242 = vmul.f32 %v239, 0.0033333334
          %v243 = vmul.f32 %v241, 0.0033333334
          %v244 = vld [vmem:[#allocation3] sm:$0xff]
          %v245 = vld [vmem:[#allocation3 + $0x8] sm:$0xff]
          %246 = vmax.xlane.f32.xlu0 %v244
          %v247 = vpop.xlane.xlu0 %246
          %248 = vmax.xlane.f32.xlu0 %v245
          %v249 = vpop.xlane.xlu0 %248
          %v252 = vlaneseq
          %v253 = vshrl.u32 %v252, 7
          %v254 = vsub.s32 %v211, %v253
          %v255 = vrot.slane %v242, %v254
          %v256 = vlaneseq
          %v257 = vshrl.u32 %v256, 7
          %v258 = vsub.s32 %v211, %v257
          %v259 = vrot.slane %v243, %v258
          %vm260 = vcmask 1041409
          %v261 = vsel %vm260, %v259, %v255
          %v265 = vlaneseq
          %v266 = vshrl.u32 %v265, 7
          %v267 = vsub.s32 %v211, %v266
          %v268 = vrot.slane %v247, %v267
          %v269 = vlaneseq
          %v270 = vshrl.u32 %v269, 7
          %v271 = vsub.s32 %v211, %v270
          %v272 = vrot.slane %v249, %v271
          %vm273 = vcmask 1043459
          %v274 = vsel %vm273, %v272, %v268
          %vm276 = vcmask 1041408
          %v277 = vsel %vm276, %v261, %v274
          %v278 = vld [vmem:[%s1] sm:$0xff]
          %vm279 = vcmask 64512
          %v281 = vsel %vm279, %v277, 0
          %283 = vmatprep.subr.mxu0 0.0
          %284 = vmatpush1.msra.mxu0 %v278
          %285 = vmatprep.subr.mxu0 0.0
          %286 = vmatpush1.msra.mxu0 0.0
          %287 = vmatprep.subr.mxu0 0.0
          %288 = vmatpush1.msra.mxu0 0.0
          %289 = vmatprep.subr.mxu0 0.0
          %290 = vmatpush1.msra.mxu0 0.0
          %291 = vmatprep.subr.mxu0 0.0
          %292 = vmatpush1.msra.mxu0 0.0
          %293 = vmatprep.subr.mxu0 0.0
          %294 = vmatpush1.msra.mxu0 0.0
          %295 = vmatprep.subr.mxu0 0.0
          %296 = vmatpush1.msra.mxu0 0.0
          %297 = vmatprep.subr.mxu0 0.0
          %298 = vmatpush1.msra.mxu0 0.0
          %299 = vmatprep.subr.mxu0 0.0
          %300 = vmatpush1.msra.mxu0 0.0
          %301 = vmatprep.subr.mxu0 0.0
          %302 = vmatpush1.msra.mxu0 0.0
          %303 = vmatprep.subr.mxu0 0.0
          %304 = vmatpush1.msra.mxu0 0.0
          %305 = vmatprep.subr.mxu0 0.0
          %306 = vmatpush1.msra.mxu0 0.0
          %307 = vmatprep.subr.mxu0 0.0
          %308 = vmatpush1.msra.mxu0 0.0
          %309 = vmatprep.subr.mxu0 0.0
          %310 = vmatpush1.msra.mxu0 0.0
          %311 = vmatprep.subr.mxu0 0.0
          %312 = vmatpush1.msra.mxu0 0.0
          %313 = vmatprep.subr.mxu0 0.0
          %314 = vmatpush1.msra.mxu0 0.0
          %315 = vmatprep.subr.mxu0 0.0
          %316 = vmatpush1.msra.mxu0 0.0
          %317 = vmatprep.subr.mxu0 0.0
          %318 = vmatpush1.msra.mxu0 0.0
          %319 = vmatprep.subr.mxu0 0.0
          %320 = vmatpush1.msra.mxu0 0.0
          %321 = vmatprep.subr.mxu0 0.0
          %322 = vmatpush1.msra.mxu0 0.0
          %323 = vmatprep.subr.mxu0 0.0
          %324 = vmatpush1.msra.mxu0 0.0
          %325 = vmatprep.subr.mxu0 0.0
          %326 = vmatpush1.msra.mxu0 0.0
          %327 = vmatprep.subr.mxu0 0.0
          %328 = vmatpush1.msra.mxu0 0.0
          %329 = vmatprep.subr.mxu0 0.0
          %330 = vmatpush1.msra.mxu0 0.0
          %331 = vmatprep.subr.mxu0 0.0
          %332 = vmatpush1.msra.mxu0 0.0
          %333 = vmatprep.subr.mxu0 0.0
          %334 = vmatpush1.msra.mxu0 0.0
          %335 = vmatprep.subr.mxu0 0.0
          %336 = vmatpush1.msra.mxu0 0.0
          %337 = vmatprep.subr.mxu0 0.0
          %338 = vmatpush1.msra.mxu0 0.0
          %339 = vmatprep.subr.mxu0 0.0
          %340 = vmatpush1.msra.mxu0 0.0
          %341 = vmatprep.subr.mxu0 0.0
          %342 = vmatpush1.msra.mxu0 0.0
          %343 = vmatprep.subr.mxu0 0.0
          %344 = vmatpush1.msra.mxu0 0.0
          %345 = vmatprep.subr.mxu0 0.0
          %346 = vmatpush1.msra.mxu0 0.0
          %347 = vmatprep.mubr.f32.mxu0 0.0
          %348 = vmatmul.mubr.f32.gmra.mrb[0].mxu0 %v281
          %v349 = vpop.f32.mrb[0].mxu0
          %v350 = vadd.f32 0.0, %v349
          %v351 = vpop.f32.mrb[0].mxu0
          %352 = vdwg.mxu0
          %v353 = vmax.f32 %v350, 0.0
          %v354 = vld [vmem:[%s2] sm:$0x3]
          %vm355 = vcmask 15360
          %v357 = vsel %vm355, %v353, 0
          %v360 = vsel %vm276, %v354, 0
          %362 = vmatprep.subr.mxu0 0.0
          %363 = vmatpush1.msra.mxu0 %v360
          %364 = vmatprep.subr.mxu0 0.0
          %365 = vmatpush1.msra.mxu0 0.0
          %366 = vmatprep.subr.mxu0 0.0
          %367 = vmatpush1.msra.mxu0 0.0
          %368 = vmatprep.subr.mxu0 0.0
          %369 = vmatpush1.msra.mxu0 0.0
          %370 = vmatprep.subr.mxu0 0.0
          %371 = vmatpush1.msra.mxu0 0.0
          %372 = vmatprep.subr.mxu0 0.0
          %373 = vmatpush1.msra.mxu0 0.0
          %374 = vmatprep.subr.mxu0 0.0
          %375 = vmatpush1.msra.mxu0 0.0
          %376 = vmatprep.subr.mxu0 0.0
          %377 = vmatpush1.msra.mxu0 0.0
          %378 = vmatprep.subr.mxu0 0.0
          %379 = vmatpush1.msra.mxu0 0.0
          %380 = vmatprep.subr.mxu0 0.0
          %381 = vmatpush1.msra.mxu0 0.0
          %382 = vmatprep.subr.mxu0 0.0
          %383 = vmatpush1.msra.mxu0 0.0
          %384 = vmatprep.subr.mxu0 0.0
          %385 = vmatpush1.msra.mxu0 0.0
          %386 = vmatprep.subr.mxu0 0.0
          %387 = vmatpush1.msra.mxu0 0.0
          %388 = vmatprep.subr.mxu0 0.0
          %389 = vmatpush1.msra.mxu0 0.0
          %390 = vmatprep.subr.mxu0 0.0
          %391 = vmatpush1.msra.mxu0 0.0
          %392 = vmatprep.subr.mxu0 0.0
          %393 = vmatpush1.msra.mxu0 0.0
          %394 = vmatprep.subr.mxu0 0.0
          %395 = vmatpush1.msra.mxu0 0.0
          %396 = vmatprep.subr.mxu0 0.0
          %397 = vmatpush1.msra.mxu0 0.0
          %398 = vmatprep.subr.mxu0 0.0
          %399 = vmatpush1.msra.mxu0 0.0
          %400 = vmatprep.subr.mxu0 0.0
          %401 = vmatpush1.msra.mxu0 0.0
          %402 = vmatprep.subr.mxu0 0.0
          %403 = vmatpush1.msra.mxu0 0.0
          %404 = vmatprep.subr.mxu0 0.0
          %405 = vmatpush1.msra.mxu0 0.0
          %406 = vmatprep.subr.mxu0 0.0
          %407 = vmatpush1.msra.mxu0 0.0
          %408 = vmatprep.subr.mxu0 0.0
          %409 = vmatpush1.msra.mxu0 0.0
          %410 = vmatprep.subr.mxu0 0.0
          %411 = vmatpush1.msra.mxu0 0.0
          %412 = vmatprep.subr.mxu0 0.0
          %413 = vmatpush1.msra.mxu0 0.0
          %414 = vmatprep.subr.mxu0 0.0
          %415 = vmatpush1.msra.mxu0 0.0
          %416 = vmatprep.subr.mxu0 0.0
          %417 = vmatpush1.msra.mxu0 0.0
          %418 = vmatprep.subr.mxu0 0.0
          %419 = vmatpush1.msra.mxu0 0.0
          %420 = vmatprep.subr.mxu0 0.0
          %421 = vmatpush1.msra.mxu0 0.0
          %422 = vmatprep.subr.mxu0 0.0
          %423 = vmatpush1.msra.mxu0 0.0
          %424 = vmatprep.subr.mxu0 0.0
          %425 = vmatpush1.msra.mxu0 0.0
          %426 = vmatprep.mubr.f32.mxu0 0.0
          %427 = vmatmul.mubr.f32.gmra.mrb[0].mxu0 %v357
          %v428 = vpop.f32.mrb[0].mxu0
          %v429 = vadd.f32 0.0, %v428
          %v430 = vpop.f32.mrb[0].mxu0
          %431 = vdwg.mxu0
          %v433 = vrot.slane %v429, 2
          %v435 = vadd.f32 %v429, %v433
          %v436 = vxor.u32 %v435, 2147483648
          %v437 = vmul.f32 %v436, 1.442695
          %v438 = vpow.pop %v437
          %v439 = vadd.f32 %v438, 1.0
          %v440 = vrcp.pop %v439
          %v441 = vmul.f32 1.0, %v440
          %v444 = vunpack.c.l.s4 1966171168
          %v445 = vunpack.c.0.s8 %v444
          %v446 = vlaneseq
          %v447 = vshrl.u32 %v446, 7
          %v448 = vsub.s32 %v445, %v447
          %v449 = vrot.slane %v441, %v448
          %v450 = vcombine.high %v449, %v449
          %v452 = vunpack.c.l.s4 1966171168
          %v453 = vunpack.c.0.s8 %v452
          %v454 = vlaneseq
          %v455 = vshrl.u32 %v454, 7
          %v456 = vsub.s32 %v453, %v455
          %v457 = vrot.slane %v449, %v456
          %v459 = vunpack.c.l.s4 1966171168
          %v460 = vunpack.c.0.s8 %v459
          %v461 = vlaneseq
          %v462 = vshrl.u32 %v461, 7
          %v463 = vsub.s32 %v460, %v462
          %v464 = vrot.slane %v450, %v463
          %vm467 = vcmask 57344
          %468 = vst.msk [vmem:[#allocation7] sm:$0x1] %vm467, %v457
          %469 = vst.msk [vmem:[#allocation7 + $0x1] sm:$0x1] %vm467, %v464
        $region44: #{tpu_custom_call.1} parent=31 // pred_fallthru
          _
        // Predicated region
        $region45: #{tpu_custom_call.1} parent=31 // pred_check
          %p470 = pneg %p118
        $region46: #{tpu_custom_call.1} parent=31 // pred_check_branch
          %472 = sbr.rel (%p470) target = $region48
        $region47: #{tpu_custom_call.1} parent=31 // pred_region
          %s473 = smul.u32 2, %s22
          %s475 = ssub.s32 32, 32
          %476 = vsyncadd [#allocation6], %s475
          %s477 = smul.addr %s473, 16
          %s478 = scalar_lea.hbm %s3, %s477
          %s479 = sshll.u32 [#allocation7], 4
          %s480 = int_to_ptr.vmem [resolvable:$true] %s479
          %485 = dma.vmem_to_hbm [thread:$0]  %s480, 32, %s478, [#allocation6], 16, 16, 1
        $region48: #{tpu_custom_call.1} parent=31 // pred_fallthru
          _
        // Predicated region
        $region49: #{tpu_custom_call.1} parent=31 // pred_check
          %p486 = pneg %p118
        $region50: #{tpu_custom_call.1} parent=31 // pred_check_branch
          %488 = sbr.rel (%p486) target = $region52
        $region51: #{tpu_custom_call.1} parent=31 // pred_region
          %489 = dma.done [#allocation6], 32
        $region52: #{tpu_custom_call.1} parent=31 // pred_fallthru
          _
      $region32: #{tpu_custom_call.1} parent=5 // pred_fallthru
        _
      %p490 = scmp.le.s32.totalorder 2, %s13
      // Predicated region
      $region53: #{tpu_custom_call.1} parent=5 // pred_check
        %p491 = pneg %p490
      $region54: #{tpu_custom_call.1} parent=5 // pred_check_branch
        %493 = sbr.rel (%p491) target = $region56
      $region55: #{tpu_custom_call.1} parent=5 // pred_region
        %s494 = ssub.s32 %s13, 2
      $region56: #{tpu_custom_call.1} parent=5 // pred_fallthru
        _
    $region6: #{tpu_custom_call.1} parent=1 // loop_footer
      %s17 = sadd.s32 1, %s13
    $region7: #{tpu_custom_call.1} parent=1 // loop_footer_branch
      %12 = sbr.rel target = $region3
    $region8: #{tpu_custom_call.1} parent=1 // loop_exit
      _
    %495 = vsyncpa [#allocation5], 1
    %s496 = scalar_lea.sflag [#allocation5], 1
    %497 = vsyncpa %s496, 1
    %498 = vsyncpa [#allocation6], 1
    %s499 = scalar_lea.sflag [#allocation6], 1
    %500 = vsyncpa %s499, 1

</llo_original>
